<compile_context>
chip_gen: v6e
topology: v6e:2x2x1
jax: 0.10.0
libtpu: 0.0.40
codegen_flags: <defaults>
</compile_context>

<pallas_src>
import functools

import jax
import jax.numpy as jnp
from jax.experimental import pallas as pl
from jax.experimental.pallas import tpu as pltpu

_LANE = 128
_SUBLANE = 8
_CHUNK_ROWS = 512           # rows reduced per inner-loop step (256 KiB f32)
_MAX_TILE_ROWS = 8192       # (8192, 128) f32 = 4 MiB per input per grid step
_MIN_SPLIT_ROWS = 2048      # force >= 2 grid blocks above this (v7x megacore)
_VMEM_LIMIT_BYTES = 32 * 1024 * 1024


def _round_up(x, m):
    return -(-x // m) * m


def _sublane_multiple(*dtypes):
    """Packed sublane multiple: 8 for 4-byte, 16 for 2-byte, 32 for 1-byte."""
    m = _SUBLANE
    for dt in dtypes:
        m = max(m, 32 // max(1, jnp.dtype(dt).itemsize))
    return m


def _choose_tile_rows(rows, sub_mult):
    if rows <= _CHUNK_ROWS:
        # Single small block; round up so the in-kernel (g, 8, 128) reshape and
        # the dtype min-tile constraint always hold (OOB rows are masked).
        return _round_up(rows, sub_mult)
    if rows <= _MIN_SPLIT_ROWS:
        # Single block, chunked inner loop (tile is a multiple of _CHUNK_ROWS,
        # which is a multiple of every packed sublane count).
        return _round_up(rows, _CHUNK_ROWS)
    # Enough work to split: guarantee >= 2 blocks so both v7x TensorCores are
    # busy, capped at _MAX_TILE_ROWS (4 MiB f32 per input per step).
    half = -(-rows // 2)
    return min(_MAX_TILE_ROWS, _round_up(half, _CHUNK_ROWS))


def _dice_partial_kernel(rows_total, tile_rows, num_blocks,
                         t_ref, p_ref, out_ref):
    """Per-block partials: out[0, 0:8] = sum(t*p), out[0, 8:16] = sum(t+p)."""
    chunk = min(_CHUNK_ROWS, tile_rows)
    n_chunks = tile_rows // chunk          # exact by construction
    ragged = (rows_total % tile_rows) != 0
    block_start = pl.program_id(0) * tile_rows

    def chunk_partials(c, masked):
        r0 = c * chunk
        if not isinstance(r0, int):
            r0 = pl.multiple_of(r0, chunk)
        t = t_ref[pl.ds(r0, chunk), :].astype(jnp.float32)
        p = p_ref[pl.ds(r0, chunk), :].astype(jnp.float32)
        if masked:
            # Rows past `rows_total` are outside the array; their VMEM content
            # is unspecified, so zero them before reducing.
            row_ids = (block_start + r0
                       + jax.lax.broadcasted_iota(jnp.int32, (chunk, _LANE), 0))
            keep = row_ids < rows_total
            t = jnp.where(keep, t, 0.0)
            p = jnp.where(keep, p, 0.0)
        g = chunk // _SUBLANE
        # Pure cross-vreg VPU adds; the cross-lane reduce happens once, outside.
        inter = jnp.sum((t * p).reshape(g, _SUBLANE, _LANE), axis=0)
        total = jnp.sum((t + p).reshape(g, _SUBLANE, _LANE), axis=0)
        return inter, total

    def reduce_block(masked):
        if n_chunks == 1:
            inter, total = chunk_partials(0, masked)
        else:
            def body(c, carry):
                i_acc, s_acc = carry
                inter_c, total_c = chunk_partials(c, masked)
                return i_acc + inter_c, s_acc + total_c

            zero = jnp.zeros((_SUBLANE, _LANE), jnp.float32)
            inter, total = jax.lax.fori_loop(0, n_chunks, body, (zero, zero))
        out_ref[0, :_SUBLANE, :] = inter
        out_ref[0, _SUBLANE:, :] = total

    if not ragged:
        reduce_block(masked=False)
    else:
        i = pl.program_id(0)

        @pl.when(i != num_blocks - 1)
        def _():
            reduce_block(masked=False)

        @pl.when(i == num_blocks - 1)
        def _():
            reduce_block(masked=True)


def dice_loss(y_true, y_preds, smooth=1.0):
    """Pallas implementation of DiceLoss.forward(y_true, y_preds, smooth)."""
    t = jnp.ravel(y_true)
    p = jnp.ravel(y_preds)
    n = t.shape[0]

    # Only a <=127-element zero pad is ever materialised, and only when the
    # flat length is not lane-aligned (zeros contribute nothing to the sums).
    # Row-level raggedness is masked in-kernel, so typical shapes need no copy.
    pad = (-n) % _LANE
    if pad:
        t = jnp.pad(t, (0, pad))
        p = jnp.pad(p, (0, pad))
    rows = (n + pad) // _LANE

    sub_mult = _sublane_multiple(t.dtype, p.dtype)
    tile_rows = _choose_tile_rows(rows, sub_mult)
    num_blocks = -(-rows // tile_rows)

    t2 = t.reshape(rows, _LANE)
    p2 = p.reshape(rows, _LANE)

    kernel = functools.partial(_dice_partial_kernel, rows, tile_rows, num_blocks)
    out_shape = jax.ShapeDtypeStruct((num_blocks, 2 * _SUBLANE, _LANE),
                                     jnp.float32)

    cost = pl.CostEstimate(
        flops=4 * rows * _LANE,
        transcendentals=0,
        bytes_accessed=rows * _LANE * (t2.dtype.itemsize + p2.dtype.itemsize)
        + num_blocks * 2 * _SUBLANE * _LANE * 4,
    )

    parts = pl.pallas_call(
        kernel,
        out_shape=out_shape,
        grid_spec=pltpu.PrefetchScalarGridSpec(
            num_scalar_prefetch=0,
            grid=(num_blocks,),
            in_specs=[
                pl.BlockSpec((tile_rows, _LANE), lambda i: (i, 0)),
                pl.BlockSpec((tile_rows, _LANE), lambda i: (i, 0)),
            ],
            out_specs=pl.BlockSpec((1, 2 * _SUBLANE, _LANE),
                                   lambda i: (i, 0, 0)),
        ),
        compiler_params=pltpu.CompilerParams(
            dimension_semantics=("parallel",),
            vmem_limit_bytes=_VMEM_LIMIT_BYTES,
        ),
        cost_estimate=cost,
    )(t2, p2)

    intersection = jnp.sum(parts[:, :_SUBLANE, :])
    total = jnp.sum(parts[:, _SUBLANE:, :])
    smooth = jnp.float32(smooth)
    dice = (2.0 * intersection + smooth) / (total + smooth)
    return 1.0 - dice


def dice_loss_ref(y_true, y_preds, smooth=1.0):
    inputs = jnp.ravel(y_preds).astype(jnp.float32)
    targets = jnp.ravel(y_true).astype(jnp.float32)
    intersection = jnp.sum(inputs * targets)
    return 1.0 - (2.0 * intersection + smooth) / (
        jnp.sum(inputs) + jnp.sum(targets) + smooth)


if __name__ == "__main__":
    key = jax.random.PRNGKey(0)

    cases = [
        ((2, 4, 16, 16), jnp.float32),     # aligned NCHW, single unmasked block
        ((2, 3, 17, 19), jnp.float32),     # flat length not lane-aligned (pad path)
        ((1, 4, 640, 128), jnp.float32),   # multi-block parallel grid + masked ragged tail
        ((2, 4, 16, 16), jnp.bfloat16),    # native sub-32-bit streaming
    ]

    for idx, (shape, dtype) in enumerate(cases):
        k1, k2 = jax.random.split(jax.random.fold_in(key, idx))
        y_preds = jax.nn.sigmoid(
            jax.random.normal(k1, shape, dtype=jnp.float32)).astype(dtype)
        y_true = (jax.random.uniform(k2, shape) > 0.5).astype(dtype)

        loss = jax.block_until_ready(dice_loss(y_true, y_preds, smooth=1.0))
        ref = dice_loss_ref(y_true, y_preds, smooth=1.0)
        assert jnp.allclose(loss, ref, rtol=1e-4, atol=1e-5), (shape, dtype, loss, ref)

    print("KERNEL_OK")
</pallas_src>

<mosaic_0001>
module attributes {stable_mosaic.version = 11 : i64} {
  func.func @_dice_partial_kernel(%arg0: i32, %arg1: memref<16x128xf32, #tpu.memory_space<vmem>>, %arg2: memref<16x128xf32, #tpu.memory_space<vmem>>, %arg3: memref<1x16x128xf32, #tpu.memory_space<vmem>>) attributes {dimension_semantics = [#tpu.dimension_semantics<parallel>], iteration_bounds = array<i64: 1>, scalar_prefetch = 0 : i64, scratch_operands = 0 : i64, tpu.core_type = #tpu.core_type<tc>, window_params = [{transform_indices = @transform_0, window_bounds = array<i64: 16, 128>}, {transform_indices = @transform_1, window_bounds = array<i64: 16, 128>}, {transform_indices = @transform_2, window_bounds = array<i64: 1, 16, 128>}]} {
    %c0 = arith.constant 0 : index
    %c0_0 = arith.constant 0 : index
    %0 = vector.load %arg1[%c0, %c0_0] : memref<16x128xf32, #tpu.memory_space<vmem>>, vector<16x128xf32>
    %c0_1 = arith.constant 0 : index
    %c0_2 = arith.constant 0 : index
    %1 = vector.load %arg2[%c0_1, %c0_2] : memref<16x128xf32, #tpu.memory_space<vmem>>, vector<16x128xf32>
    %2 = arith.mulf %0, %1 : vector<16x128xf32>
    %3 = vector.shape_cast %2 : vector<16x128xf32> to vector<2x8x128xf32>
    %cst = arith.constant dense<0.000000e+00> : vector<8x128xf32>
    %4 = vector.multi_reduction <add>, %3, %cst [0] : vector<2x8x128xf32> to vector<8x128xf32>
    %5 = arith.addf %0, %1 : vector<16x128xf32>
    %6 = vector.shape_cast %5 : vector<16x128xf32> to vector<2x8x128xf32>
    %cst_3 = arith.constant dense<0.000000e+00> : vector<8x128xf32>
    %7 = vector.multi_reduction <add>, %6, %cst_3 [0] : vector<2x8x128xf32> to vector<8x128xf32>
    %c0_4 = arith.constant 0 : index
    %c0_5 = arith.constant 0 : index
    %c0_6 = arith.constant 0 : index
    %8 = vector.load %arg3[%c0_4, %c0_5, %c0_6] : memref<1x16x128xf32, #tpu.memory_space<vmem>>, vector<1x8x128xf32>
    %9 = vector.shape_cast %8 : vector<1x8x128xf32> to vector<8x128xf32>
    %10 = vector.shape_cast %4 : vector<8x128xf32> to vector<1x8x128xf32>
    tpu.vector_store %arg3[%c0_4, %c0_5, %c0_6], %10 {strides = array<i32>} : memref<1x16x128xf32, #tpu.memory_space<vmem>>, vector<1x8x128xf32>,
    %c0_7 = arith.constant 0 : index
    %c8 = arith.constant 8 : index
    %c0_8 = arith.constant 0 : index
    %11 = vector.load %arg3[%c0_7, %c8, %c0_8] : memref<1x16x128xf32, #tpu.memory_space<vmem>>, vector<1x8x128xf32>
    %12 = vector.shape_cast %11 : vector<1x8x128xf32> to vector<8x128xf32>
    %13 = vector.shape_cast %7 : vector<8x128xf32> to vector<1x8x128xf32>
    tpu.vector_store %arg3[%c0_7, %c8, %c0_8], %13 {strides = array<i32>} : memref<1x16x128xf32, #tpu.memory_space<vmem>>, vector<1x8x128xf32>,
    return
  }
  func.func @transform_0(%arg0: i32) -> (i32, i32) {
    %c0_i32 = arith.constant 0 : i32
    %c0_i32_0 = arith.constant 0 : i32
    return %arg0, %c0_i32 : i32, i32
  }
  func.func @transform_1(%arg0: i32) -> (i32, i32) {
    %c0_i32 = arith.constant 0 : i32
    %c0_i32_0 = arith.constant 0 : i32
    return %arg0, %c0_i32 : i32, i32
  }
  func.func @transform_2(%arg0: i32) -> (i32, i32, i32) {
    %c0_i32 = arith.constant 0 : i32
    %c0_i32_0 = arith.constant 0 : i32
    %c0_i32_1 = arith.constant 0 : i32
    return %arg0, %c0_i32, %c0_i32_0 : i32, i32, i32
  }
}

</mosaic_0001>

<llo_original>
// kernel: tpu_custom_call.1
$region0: #{tpu_custom_call.1}
  #allocation0 [shape = 'u32[]', space=smem, size = 0x4, offset = 0x4, fixed_abs, tag = 'smem constant byte address 0x4 - core index']
  #allocation1 [shape = 'u32[144,128]{1,0:T(1,128)}', space=vmem, size = 0x12000, scoped, tag = 'internal scratch']
  %s0 = inlined_call_operand.hbm [shape: f32[16,128], index: 0, kind: input, shape index: {}]
  %s1 = inlined_call_operand.hbm [shape: f32[16,128], index: 1, kind: input, shape index: {}]
  %s2 = inlined_call_operand.hbm [shape: f32[1,16,128], index: 2, kind: output, shape index: {}]
  %s3 = sld [smem:[#allocation0]]
  $region26: #{tpu_custom_call.1} parent=0
    _
  %s5 = ssub.s32 1, %s3
  %s6 = scalar_select 0, %s5, %s3
  $region1: #{tpu_custom_call.1} parent=0
    #allocation2 [shape = 'u8[8192]{0}', space=vmem, size = 0x2000, scoped, tag = 'input window, operand 0, single buffered']
    #allocation3 [shape = 's32[1]{0}', space=sflag, size = 0x4, scoped, tag = 'scoped memory for tpu_custom_call.1']
    #allocation4 [shape = 's32[1]{0}', space=sflag, size = 0x4, scoped, tag = 'scoped memory for tpu_custom_call.1']
    #allocation5 [shape = 'u8[8192]{0}', space=vmem, size = 0x2000, scoped, tag = 'input window, operand 1, single buffered']
    #allocation6 [shape = 's32[1]{0}', space=sflag, size = 0x4, scoped, tag = 'scoped memory for tpu_custom_call.1']
    #allocation7 [shape = 'u8[8192]{0}', space=vmem, size = 0x2000, scoped, tag = 'output window, operand 0, single buffered']
    %7 = vsyncpa [#allocation3], 0
    %8 = vsyncpa [#allocation6], 0
    %9 = vsyncpa [#allocation4], 0
    // Predicated region
    $region2: #{tpu_custom_call.1} parent=1 // pred_check
      _
    $region3: #{tpu_custom_call.1} parent=1 // pred_check_branch
      %11 = sbr.rel (0) target = $region5
    $region4: #{tpu_custom_call.1} parent=1 // pred_region
      %s13 = ssub.s32 256, 256
      %14 = vsyncadd [#allocation3], %s13
      %s15 = sshll.u32 [#allocation2], 4
      %s16 = int_to_ptr.vmem [resolvable:$true] %s15
      %21 = dma.hbm_to_vmem [thread:$0]  %s0, 256, %s16, [#allocation3], 128, 128, 8
    $region5: #{tpu_custom_call.1} parent=1 // pred_fallthru
      _
    // Predicated region
    $region6: #{tpu_custom_call.1} parent=1 // pred_check
      _
    $region7: #{tpu_custom_call.1} parent=1 // pred_check_branch
      %23 = sbr.rel (0) target = $region9
    $region8: #{tpu_custom_call.1} parent=1 // pred_region
      %s25 = ssub.s32 256, 256
      %26 = vsyncadd [#allocation6], %s25
      %s27 = sshll.u32 [#allocation5], 4
      %s28 = int_to_ptr.vmem [resolvable:$true] %s27
      %33 = dma.hbm_to_vmem [thread:$0]  %s1, 256, %s28, [#allocation6], 128, 128, 8
    $region9: #{tpu_custom_call.1} parent=1 // pred_fallthru
      _
    // Predicated region
    $region10: #{tpu_custom_call.1} parent=1 // pred_check
      _
    $region11: #{tpu_custom_call.1} parent=1 // pred_check_branch
      %35 = sbr.rel (0) target = $region13
    $region12: #{tpu_custom_call.1} parent=1 // pred_region
      %36 = dma.done [#allocation3], 256
    $region13: #{tpu_custom_call.1} parent=1 // pred_fallthru
      _
    // Predicated region
    $region14: #{tpu_custom_call.1} parent=1 // pred_check
      _
    $region15: #{tpu_custom_call.1} parent=1 // pred_check_branch
      %38 = sbr.rel (0) target = $region17
    $region16: #{tpu_custom_call.1} parent=1 // pred_region
      %39 = dma.done [#allocation6], 256
    $region17: #{tpu_custom_call.1} parent=1 // pred_fallthru
      _
    %v40 = vld [vmem:[#allocation2] sm:$0xff]
    %v41 = vld [vmem:[#allocation2 + $0x8] sm:$0xff]
    %v42 = vld [vmem:[#allocation5] sm:$0xff]
    %v43 = vld [vmem:[#allocation5 + $0x8] sm:$0xff]
    %v44 = vmul.f32 %v40, %v42
    %v45 = vmul.f32 %v41, %v43
    %v46 = vadd.f32 %v44, %v45
    %v47 = vadd.f32 %v40, %v42
    %v48 = vadd.f32 %v41, %v43
    %v49 = vadd.f32 %v47, %v48
    %50 = vst [vmem:[#allocation7] sm:$0xff] %v46
    %51 = vst [vmem:[#allocation7 + $0x8] sm:$0xff] %v49
    // Predicated region
    $region18: #{tpu_custom_call.1} parent=1 // pred_check
      _
    $region19: #{tpu_custom_call.1} parent=1 // pred_check_branch
      %53 = sbr.rel (0) target = $region21
    $region20: #{tpu_custom_call.1} parent=1 // pred_region
      %s55 = ssub.s32 256, 256
      %56 = vsyncadd [#allocation4], %s55
      %s57 = sshll.u32 [#allocation7], 4
      %s58 = int_to_ptr.vmem [resolvable:$true] %s57
      %63 = dma.vmem_to_hbm [thread:$0]  %s58, 256, %s2, [#allocation4], 128, 128, 8
    $region21: #{tpu_custom_call.1} parent=1 // pred_fallthru
      _
    // Predicated region
    $region22: #{tpu_custom_call.1} parent=1 // pred_check
      _
    $region23: #{tpu_custom_call.1} parent=1 // pred_check_branch
      %65 = sbr.rel (0) target = $region25
    $region24: #{tpu_custom_call.1} parent=1 // pred_region
      %66 = dma.done [#allocation4], 256
    $region25: #{tpu_custom_call.1} parent=1 // pred_fallthru
      _
    %67 = vsyncpa [#allocation3], 1
    %68 = vsyncpa [#allocation6], 1
    %69 = vsyncpa [#allocation4], 1

</llo_original>
